<compile_context>
chip_gen: v5e
topology: v5e:2x2
jax: 0.10.0
libtpu: 0.0.40
codegen_flags: <defaults>
</compile_context>

<pallas_src>
import functools

import jax
import jax.numpy as jnp
from jax.experimental import pallas as pl
from jax.experimental.pallas import tpu as pltpu

BN_EPS = 1e-5

PRIMITIVES = [
    "none",
    "max_pool_3x3",
    "avg_pool_3x3",
    "skip_connect",
    "sep_conv_3x3",
    "sep_conv_5x5",
    "dil_conv_3x3",
    "dil_conv_5x5",
]


# ---------------------------------------------------------------------------
# In-kernel helpers
# ---------------------------------------------------------------------------
def _bn_2d(y2d):
    """BatchNorm2d(affine=False), training mode, single-pass stats, on (N*H*W, C)."""
    m = y2d.shape[0]
    s = jnp.sum(y2d, axis=0, keepdims=True)
    ss = jnp.sum(y2d * y2d, axis=0, keepdims=True)
    mean = s * (1.0 / m)
    var = jnp.maximum(ss * (1.0 / m) - mean * mean, 0.0)   # biased variance
    return (y2d - mean) * jax.lax.rsqrt(var + BN_EPS)


def _fill_padded(xpad_ref, interior, pad, fill_value):
    """Write `interior` (N,H,W,C) into the center of the (N,H+2p,W+2p,C) VMEM scratch."""
    N, H, W, C = interior.shape
    xpad_ref[...] = jnp.full(xpad_ref.shape, fill_value, jnp.float32)
    xpad_ref[:, pl.ds(pad, H), pl.ds(pad, W), :] = interior
    return xpad_ref[...]


def _relu_dw_pw_bn_stage(x, xpad_ref, dw, pw, *, K, pad, dilation, H, W):
    """ReLU -> depthwise KxK (dilated, stride 1, 'same' zero pad) -> 1x1 conv -> BN.

    x: (N,H,W,C) f32 value. xpad_ref: (N,H+2p,W+2p,C) VMEM scratch (reused/overwritten).
    dw: (K*K, C) depthwise taps, pw: (C, C) pointwise weights.
    """
    N, C = x.shape[0], x.shape[3]
    # in-kernel zero padding; ReLU first (relu(0) == 0 so the pad ring stays zero)
    xp = _fill_padded(xpad_ref, jnp.maximum(x, 0.0), pad, 0.0)

    acc = jnp.zeros((N, H, W, C), jnp.float32)
    for kh in range(K):                          # unrolled VPU taps
        slab = xp[:, kh * dilation:kh * dilation + H, :, :]     # kh slab hoisted
        for kw in range(K):
            tap = slab[:, :, kw * dilation:kw * dilation + W, :]
            acc = acc + tap * dw[kh * K + kw].reshape(1, 1, 1, C)
    # TODO(synk): for realistic DARTS channel counts (C >= 128) feed bf16 operands /
    # pad C to the MXU width and tile over a channel-parallel grid.
    y = jnp.dot(acc.reshape(N * H * W, C), pw, preferred_element_type=jnp.float32)
    return _bn_2d(y).reshape(N, H, W, C)


# ---------------------------------------------------------------------------
# Pallas kernels (one fused kernel per primitive; grid = (), tensors fit VMEM)
# ---------------------------------------------------------------------------
def _sep_conv_kernel(x_ref, dw1_ref, pw1_ref, dw2_ref, pw2_ref, w_ref, o_ref,
                     xpad_ref, *, K, pad, H, W):
    """Fused SepConv: two [ReLU, dw KxK, 1x1, BN] stages + final `w * (.)` scale.

    The stage-1 activation never leaves VMEM; the padded scratch is reused.
    """
    y = _relu_dw_pw_bn_stage(x_ref[...], xpad_ref, dw1_ref[...], pw1_ref[...],
                             K=K, pad=pad, dilation=1, H=H, W=W)
    y = _relu_dw_pw_bn_stage(y, xpad_ref, dw2_ref[...], pw2_ref[...],
                             K=K, pad=pad, dilation=1, H=H, W=W)
    o_ref[...] = w_ref[0] * y


def _dil_conv_kernel(x_ref, dw_ref, pw_ref, w_ref, o_ref, xpad_ref, *, K, pad, H, W):
    """Fused DilConv: ReLU, dilated depthwise KxK (d=2), 1x1 conv, BN, w-scale."""
    y = _relu_dw_pw_bn_stage(x_ref[...], xpad_ref, dw_ref[...], pw_ref[...],
                             K=K, pad=pad, dilation=2, H=H, W=W)
    o_ref[...] = w_ref[0] * y


def _maxpool_bn_kernel(x_ref, w_ref, o_ref, xpad_ref, *, H, W):
    """MaxPool2d(3,1,1) + BN(affine=False) + w-scale, fused."""
    N, C = x_ref.shape[0], x_ref.shape[3]
    neg = float(jnp.finfo(jnp.float32).min)      # finite stand-in for -inf padding
    xp = _fill_padded(xpad_ref, x_ref[...], 1, neg)
    acc = None
    for kh in range(3):
        slab = xp[:, kh:kh + H, :, :]
        for kw in range(3):
            tap = slab[:, :, kw:kw + W, :]
            acc = tap if acc is None else jnp.maximum(acc, tap)
    y = _bn_2d(acc.reshape(N * H * W, C))
    o_ref[...] = (w_ref[0] * y).reshape(N, H, W, C)


def _avgpool_bn_kernel(x_ref, w_ref, o_ref, xpad_ref, *, H, W):
    """AvgPool2d(3,1,1, count_include_pad=False) + BN(affine=False) + w-scale, fused."""
    N, C = x_ref.shape[0], x_ref.shape[3]
    xp = _fill_padded(xpad_ref, x_ref[...], 1, 0.0)
    s = jnp.zeros((N, H, W, C), jnp.float32)
    for kh in range(3):
        slab = xp[:, kh:kh + H, :, :]
        for kw in range(3):
            s = s + slab[:, :, kw:kw + W, :]
    # count_include_pad=False -> per-(h,w) valid-tap count, built from iota in-kernel
    hi = jax.lax.broadcasted_iota(jnp.int32, (1, H, W, 1), 1)
    wi = jax.lax.broadcasted_iota(jnp.int32, (1, H, W, 1), 2)
    rows = 3.0 - (hi == 0).astype(jnp.float32) - (hi == H - 1).astype(jnp.float32)
    cols = 3.0 - (wi == 0).astype(jnp.float32) - (wi == W - 1).astype(jnp.float32)
    y = s * pl.reciprocal(rows * cols, approx=True)   # EUP reciprocal, off the VALU path
    o_ref[...] = (w_ref[0] * _bn_2d(y.reshape(N * H * W, C))).reshape(N, H, W, C)


def _skip_scale_kernel(x_ref, w_ref, o_ref):
    """skip_connect (Identity at stride=1) fused with the w-scale."""
    o_ref[...] = w_ref[0] * x_ref[...]


def _zero_kernel(w_ref, o_ref):
    """'none' (Zero op): w * (x * 0) == 0; never reads the activation from HBM."""
    del w_ref
    o_ref[...] = jnp.zeros(o_ref.shape, o_ref.dtype)


# ---------------------------------------------------------------------------
# pallas_call wrappers
# ---------------------------------------------------------------------------
def _op_call(kernel, out_shape, scratch_shapes, *args):
    """args = (*vmem_tensor_inputs, w_scalar); w goes to SMEM, everything else VMEM."""
    in_specs = ([pl.BlockSpec(memory_space=pltpu.MemorySpace.VMEM)
                 for _ in args[:-1]]
                + [pl.BlockSpec(memory_space=pltpu.MemorySpace.SMEM)])
    # TODO(synk): at realistic activation/channel sizes, switch to a channel-parallel
    # grid with BlockSpecs (lane-dense 128-wide blocks) instead of whole-tensor blocks.
    return pl.pallas_call(
        kernel,
        out_shape=jax.ShapeDtypeStruct(out_shape, jnp.float32),
        in_specs=in_specs,
        out_specs=pl.BlockSpec(memory_space=pltpu.MemorySpace.VMEM),
        scratch_shapes=list(scratch_shapes),
        compiler_params=pltpu.CompilerParams(vmem_limit_bytes=32 * 1024 * 1024),
    )(*args)


def _sep_conv(x, p, K, pad, w1):
    N, H, W, C = x.shape
    kern = functools.partial(_sep_conv_kernel, K=K, pad=pad, H=H, W=W)
    scratch = [pltpu.VMEM((N, H + 2 * pad, W + 2 * pad, C), jnp.float32)]
    return _op_call(kern, (N, H, W, C), scratch,
                    x, p["dw1"], p["pw1"], p["dw2"], p["pw2"], w1)


def _dil_conv(x, p, K, pad, w1):
    N, H, W, C = x.shape
    kern = functools.partial(_dil_conv_kernel, K=K, pad=pad, H=H, W=W)
    scratch = [pltpu.VMEM((N, H + 2 * pad, W + 2 * pad, C), jnp.float32)]
    return _op_call(kern, (N, H, W, C), scratch, x, p["dw"], p["pw"], w1)


def _max_pool_bn(x, w1):
    N, H, W, C = x.shape
    kern = functools.partial(_maxpool_bn_kernel, H=H, W=W)
    scratch = [pltpu.VMEM((N, H + 2, W + 2, C), jnp.float32)]
    return _op_call(kern, (N, H, W, C), scratch, x, w1)


def _avg_pool_bn(x, w1):
    N, H, W, C = x.shape
    kern = functools.partial(_avgpool_bn_kernel, H=H, W=W)
    scratch = [pltpu.VMEM((N, H + 2, W + 2, C), jnp.float32)]
    return _op_call(kern, (N, H, W, C), scratch, x, w1)


def _skip(x, w1):
    return _op_call(_skip_scale_kernel, x.shape, [], x, w1)


def _zero_op(shape, w1):
    return _op_call(_zero_kernel, shape, [], w1)


# ---------------------------------------------------------------------------
# MixedOp
# ---------------------------------------------------------------------------
class MixedOpPallas:
    """Pallas-TPU implementation of the EDNAS MixedOp forward pass (stride=1)."""

    def __init__(self, C, stride, key):
        if stride != 1:
            # TODO(synk): stride=2 branch (FactorizedReduce / strided pools & convs) not implemented.
            raise NotImplementedError("only stride=1 is implemented")
        self.C = C
        self.stride = stride
        self._jitted = {}
        ks = jax.random.split(key, 12)

        def _w(k, shape):
            return 0.1 * jax.random.normal(k, shape, jnp.float32)

        # depthwise weights stored as (K*K, C); pointwise as (C_in, C_out)
        self.params = {
            "sep_conv_3x3": {"dw1": _w(ks[0], (9, C)),  "pw1": _w(ks[1], (C, C)),
                             "dw2": _w(ks[2], (9, C)),  "pw2": _w(ks[3], (C, C))},
            "sep_conv_5x5": {"dw1": _w(ks[4], (25, C)), "pw1": _w(ks[5], (C, C)),
                             "dw2": _w(ks[6], (25, C)), "pw2": _w(ks[7], (C, C))},
            "dil_conv_3x3": {"dw": _w(ks[8], (9, C)),   "pw": _w(ks[9], (C, C))},
            "dil_conv_5x5": {"dw": _w(ks[10], (25, C)), "pw": _w(ks[11], (C, C))},
        }

    def _apply(self, primitive, x_nhwc, w):
        w1 = jnp.reshape(w, (1,)).astype(jnp.float32)       # SMEM scalar for the kernels
        if primitive == "none":
            return _zero_op(x_nhwc.shape, w1)
        if primitive == "max_pool_3x3":
            return _max_pool_bn(x_nhwc, w1)
        if primitive == "avg_pool_3x3":
            return _avg_pool_bn(x_nhwc, w1)
        if primitive == "skip_connect":
            return _skip(x_nhwc, w1)                         # Identity at stride=1 (+ scale)
        if primitive == "sep_conv_3x3":
            return _sep_conv(x_nhwc, self.params["sep_conv_3x3"], 3, 1, w1)
        if primitive == "sep_conv_5x5":
            return _sep_conv(x_nhwc, self.params["sep_conv_5x5"], 5, 2, w1)
        if primitive == "dil_conv_3x3":
            return _dil_conv(x_nhwc, self.params["dil_conv_3x3"], 3, 2, w1)
        if primitive == "dil_conv_5x5":
            return _dil_conv(x_nhwc, self.params["dil_conv_5x5"], 5, 4, w1)
        raise ValueError(primitive)

    def _get_jitted(self, primitive):
        if primitive not in self._jitted:
            def fn(x_nchw, w, _primitive=primitive):
                # TODO(synk): accept NHWC end-to-end to drop these two transpose passes.
                x = jnp.transpose(x_nchw, (0, 2, 3, 1)).astype(jnp.float32)  # NCHW->NHWC
                y = self._apply(_primitive, x, w)                             # fused op+BN+w*
                return jnp.transpose(y, (0, 3, 1, 2))                         # NHWC->NCHW
            self._jitted[primitive] = jax.jit(fn)
        return self._jitted[primitive]

    def forward(self, x_nchw, weights):
        # Mirrors: `for w, op in zip(weights, ops): if w.data > 0: return w * op(x)`.
        # The scalar comparison is data-dependent control flow in PyTorch; the tiny
        # weights vector is fetched to host ONCE to pick the branch, then the whole
        # selected path (transpose + fused Pallas primitive) runs jit-compiled.
        w_host = jax.device_get(jnp.asarray(weights, jnp.float32))
        w = None
        for w_val, primitive in zip(w_host, PRIMITIVES):
            w = w_val
            if float(w_val) > 0.0:
                fn = self._get_jitted(primitive)
                return fn(x_nchw, jnp.asarray(w_val, dtype=jnp.float32))
        return jnp.asarray(w, jnp.float32)       # fall-through: last weight (scalar)


# ---------------------------------------------------------------------------
if __name__ == "__main__":
    key = jax.random.PRNGKey(0)
    k_x, k_p = jax.random.split(key)

    B, C, H, W = 2, 8, 16, 16
    x = jax.random.normal(k_x, (B, C, H, W), dtype=jnp.float32)

    mixed = MixedOpPallas(C, stride=1, key=k_p)

    # Exercise every primitive: the single positive weight is the one selected.
    for sel in range(len(PRIMITIVES)):
        weights = -0.1 * jnp.ones((len(PRIMITIVES),), jnp.float32)
        weights = weights.at[sel].set(0.75)
        out = mixed.forward(x, weights)
        out = jax.block_until_ready(out)
        assert out.shape == (B, C, H, W), (PRIMITIVES[sel], out.shape)
        assert bool(jnp.all(jnp.isfinite(out))), PRIMITIVES[sel]

    # Fall-through path: no positive weight -> returns the last weight (scalar).
    fall = mixed.forward(x, -0.1 * jnp.ones((len(PRIMITIVES),), jnp.float32))
    jax.block_until_ready(fall)
    assert fall.shape == ()

    print("KERNEL_OK")
</pallas_src>

<mosaic_0001>
module attributes {stable_mosaic.version = 11 : i64} {
  func.func @_zero_kernel(%arg0: memref<1xf32, #tpu.memory_space<smem>>, %arg1: memref<2x16x16x8xf32, #tpu.memory_space<vmem>>) attributes {dimension_semantics = [], scalar_prefetch = 0 : i64, scratch_operands = 0 : i64, tpu.core_type = #tpu.core_type<tc>} {
    %cst = arith.constant 0.000000e+00 : f32
    %0 = vector.broadcast %cst : f32 to vector<2x16x16x8xf32>
    %c0 = arith.constant 0 : index
    %c0_0 = arith.constant 0 : index
    %c0_1 = arith.constant 0 : index
    %c0_2 = arith.constant 0 : index
    %1 = vector.load %arg1[%c0, %c0_0, %c0_1, %c0_2] : memref<2x16x16x8xf32, #tpu.memory_space<vmem>>, vector<2x16x16x8xf32>
    tpu.vector_store %arg1[%c0, %c0_0, %c0_1, %c0_2], %0 {strides = array<i32>} : memref<2x16x16x8xf32, #tpu.memory_space<vmem>>, vector<2x16x16x8xf32>,
    return
  }
}

</mosaic_0001>

<llo_original>
// kernel: fn.1
$region0: #{fn.1}
  #allocation0 [shape = 'u32[]', space=smem, size = 0x4, offset = 0x4, fixed_abs, tag = 'smem constant byte address 0x4 - core index']
  #allocation1 [shape = 'u32[72,128]{1,0:T(1,128)}', space=vmem, size = 0x9000, scoped, tag = 'internal scratch']
  #allocation2 [shape = 'f32[1]{0:T(128)S(6)}', space=smem, size = 0x200, scoped, tag = 'scoped memory for fn.1']
  %s0 = inlined_call_operand.<no memory space> [shape: f32[1], index: 0, kind: input, shape index: {}]
  %s1 = inlined_call_operand.vmem [shape: f32[2,16,16,8], index: 1, kind: output, shape index: {}]
  %s2 = sld [smem:[#allocation0]]
  $region14: #{fn.1} parent=0
    _
  %s4 = ssub.s32 1, %s2
  %s5 = scalar_select 0, %s4, %s2
  %6 = sst [smem:[#allocation2]] %s0
  // Predicated region
  $region2: #{fn.1} parent=0 // pred_check
    _
  $region3: #{fn.1} parent=0 // pred_check_branch
    %8 = sbr.rel (0) target = $region5
  $region4: #{fn.1} parent=0 // pred_region
    _
  $region5: #{fn.1} parent=0 // pred_fallthru
    _
  %vm9 = vcmask 64512
  %10 = vst.msk [vmem:[%s1] sm:$0xff] %vm9, 0.0
  %11 = vst.msk [vmem:[%s1 + $0x8] sm:$0xff] %vm9, 0.0
  %12 = vst.msk [vmem:[%s1 + $0x10] sm:$0xff] %vm9, 0.0
  %13 = vst.msk [vmem:[%s1 + $0x18] sm:$0xff] %vm9, 0.0
  %14 = vst.msk [vmem:[%s1 + $0x20] sm:$0xff] %vm9, 0.0
  %15 = vst.msk [vmem:[%s1 + $0x28] sm:$0xff] %vm9, 0.0
  %16 = vst.msk [vmem:[%s1 + $0x30] sm:$0xff] %vm9, 0.0
  %17 = vst.msk [vmem:[%s1 + $0x38] sm:$0xff] %vm9, 0.0
  %18 = vst.msk [vmem:[%s1 + $0x40] sm:$0xff] %vm9, 0.0
  %19 = vst.msk [vmem:[%s1 + $0x48] sm:$0xff] %vm9, 0.0
  %20 = vst.msk [vmem:[%s1 + $0x50] sm:$0xff] %vm9, 0.0
  %21 = vst.msk [vmem:[%s1 + $0x58] sm:$0xff] %vm9, 0.0
  %22 = vst.msk [vmem:[%s1 + $0x60] sm:$0xff] %vm9, 0.0
  %23 = vst.msk [vmem:[%s1 + $0x68] sm:$0xff] %vm9, 0.0
  %24 = vst.msk [vmem:[%s1 + $0x70] sm:$0xff] %vm9, 0.0
  %25 = vst.msk [vmem:[%s1 + $0x78] sm:$0xff] %vm9, 0.0
  %26 = vst.msk [vmem:[%s1 + $0x80] sm:$0xff] %vm9, 0.0
  %27 = vst.msk [vmem:[%s1 + $0x88] sm:$0xff] %vm9, 0.0
  %28 = vst.msk [vmem:[%s1 + $0x90] sm:$0xff] %vm9, 0.0
  %29 = vst.msk [vmem:[%s1 + $0x98] sm:$0xff] %vm9, 0.0
  %30 = vst.msk [vmem:[%s1 + $0xa0] sm:$0xff] %vm9, 0.0
  %31 = vst.msk [vmem:[%s1 + $0xa8] sm:$0xff] %vm9, 0.0
  %32 = vst.msk [vmem:[%s1 + $0xb0] sm:$0xff] %vm9, 0.0
  %33 = vst.msk [vmem:[%s1 + $0xb8] sm:$0xff] %vm9, 0.0
  %34 = vst.msk [vmem:[%s1 + $0xc0] sm:$0xff] %vm9, 0.0
  %35 = vst.msk [vmem:[%s1 + $0xc8] sm:$0xff] %vm9, 0.0
  %36 = vst.msk [vmem:[%s1 + $0xd0] sm:$0xff] %vm9, 0.0
  %37 = vst.msk [vmem:[%s1 + $0xd8] sm:$0xff] %vm9, 0.0
  %38 = vst.msk [vmem:[%s1 + $0xe0] sm:$0xff] %vm9, 0.0
  %39 = vst.msk [vmem:[%s1 + $0xe8] sm:$0xff] %vm9, 0.0
  %40 = vst.msk [vmem:[%s1 + $0xf0] sm:$0xff] %vm9, 0.0
  %41 = vst.msk [vmem:[%s1 + $0xf8] sm:$0xff] %vm9, 0.0
  %42 = vst.msk [vmem:[%s1 + $0x100] sm:$0xff] %vm9, 0.0
  %43 = vst.msk [vmem:[%s1 + $0x108] sm:$0xff] %vm9, 0.0
  %44 = vst.msk [vmem:[%s1 + $0x110] sm:$0xff] %vm9, 0.0
  %45 = vst.msk [vmem:[%s1 + $0x118] sm:$0xff] %vm9, 0.0
  %46 = vst.msk [vmem:[%s1 + $0x120] sm:$0xff] %vm9, 0.0
  %47 = vst.msk [vmem:[%s1 + $0x128] sm:$0xff] %vm9, 0.0
  %48 = vst.msk [vmem:[%s1 + $0x130] sm:$0xff] %vm9, 0.0
  %49 = vst.msk [vmem:[%s1 + $0x138] sm:$0xff] %vm9, 0.0
  %50 = vst.msk [vmem:[%s1 + $0x140] sm:$0xff] %vm9, 0.0
  %51 = vst.msk [vmem:[%s1 + $0x148] sm:$0xff] %vm9, 0.0
  %52 = vst.msk [vmem:[%s1 + $0x150] sm:$0xff] %vm9, 0.0
  %53 = vst.msk [vmem:[%s1 + $0x158] sm:$0xff] %vm9, 0.0
  %54 = vst.msk [vmem:[%s1 + $0x160] sm:$0xff] %vm9, 0.0
  %55 = vst.msk [vmem:[%s1 + $0x168] sm:$0xff] %vm9, 0.0
  %56 = vst.msk [vmem:[%s1 + $0x170] sm:$0xff] %vm9, 0.0
  %57 = vst.msk [vmem:[%s1 + $0x178] sm:$0xff] %vm9, 0.0
  %58 = vst.msk [vmem:[%s1 + $0x180] sm:$0xff] %vm9, 0.0
  %59 = vst.msk [vmem:[%s1 + $0x188] sm:$0xff] %vm9, 0.0
  %60 = vst.msk [vmem:[%s1 + $0x190] sm:$0xff] %vm9, 0.0
  %61 = vst.msk [vmem:[%s1 + $0x198] sm:$0xff] %vm9, 0.0
  %62 = vst.msk [vmem:[%s1 + $0x1a0] sm:$0xff] %vm9, 0.0
  %63 = vst.msk [vmem:[%s1 + $0x1a8] sm:$0xff] %vm9, 0.0
  %64 = vst.msk [vmem:[%s1 + $0x1b0] sm:$0xff] %vm9, 0.0
  %65 = vst.msk [vmem:[%s1 + $0x1b8] sm:$0xff] %vm9, 0.0
  %66 = vst.msk [vmem:[%s1 + $0x1c0] sm:$0xff] %vm9, 0.0
  %67 = vst.msk [vmem:[%s1 + $0x1c8] sm:$0xff] %vm9, 0.0
  %68 = vst.msk [vmem:[%s1 + $0x1d0] sm:$0xff] %vm9, 0.0
  %69 = vst.msk [vmem:[%s1 + $0x1d8] sm:$0xff] %vm9, 0.0
  %70 = vst.msk [vmem:[%s1 + $0x1e0] sm:$0xff] %vm9, 0.0
  %71 = vst.msk [vmem:[%s1 + $0x1e8] sm:$0xff] %vm9, 0.0
  %72 = vst.msk [vmem:[%s1 + $0x1f0] sm:$0xff] %vm9, 0.0
  %73 = vst.msk [vmem:[%s1 + $0x1f8] sm:$0xff] %vm9, 0.0
  // Predicated region
  $region6: #{fn.1} parent=0 // pred_check
    _
  $region7: #{fn.1} parent=0 // pred_check_branch
    %75 = sbr.rel (0) target = $region9
  $region8: #{fn.1} parent=0 // pred_region
    _
  $region9: #{fn.1} parent=0 // pred_fallthru
    _
  // Predicated region
  $region10: #{fn.1} parent=0 // pred_check
    _
  $region11: #{fn.1} parent=0 // pred_check_branch
    %77 = sbr.rel (0) target = $region13
  $region12: #{fn.1} parent=0 // pred_region
    _
  $region13: #{fn.1} parent=0 // pred_fallthru
    _

</llo_original>
